<compile_context>
chip_gen: v7x
topology: tpu7x:2x2x1
jax: 0.10.0
libtpu: 0.0.40
codegen_flags: <defaults>
</compile_context>

<pallas_src>
import functools

import jax
import jax.numpy as jnp
from jax.experimental import pallas as pl
from jax.experimental.pallas import tpu as pltpu

INPUT_SIZE = 768          # CLIP ViT-L/14 embedding size this predictor scores
HIDDEN = (1024, 128, 64, 16, 1)
BLOCK_B = 1024            # max batch-tile rows per grid step (sweep 512-2048)


def init_params(key, input_size=INPUT_SIZE):
    """Deterministic PyTorch-Linear-style init (uniform +-1/sqrt(fan_in))."""
    dims = (input_size,) + HIDDEN
    params = []
    for i in range(len(HIDDEN)):
        fan_in, fan_out = dims[i], dims[i + 1]
        key, kw, kb = jax.random.split(key, 3)
        bound = float(fan_in) ** -0.5
        # stored as (in, out) == PyTorch weight.T
        w = jax.random.uniform(kw, (fan_in, fan_out), jnp.float32, -bound, bound)
        b = jax.random.uniform(kb, (1, fan_out), jnp.float32, -bound, bound)
        params.append((w, b))
    return params


def fold_params(params):
    """Exact affine composition of all Linear layers.

    Valid ONLY because this architecture has no activation functions and its
    Dropout layers are identity at inference.  If a variant of the predictor
    inserts a ReLU between layers, this fold silently computes the wrong
    function — guard against that here.
    Returns (w_fold, b_fold) with shapes (D, 1) and (1, 1) such that
    x @ w_fold + b_fold == the full 5-layer forward pass.
    """
    w_fold, b_fold = params[0]
    for wi, bi in params[1:]:
        w_fold = w_fold @ wi
        b_fold = b_fold @ wi + bi
    return w_fold, b_fold


def folded_affine_kernel(x_ref, w_ref, b_ref, o_ref):
    # One GEMV per batch tile: (TB, D) @ (D, 1), f32 accumulation on the MXU,
    # then a broadcast add of the SMEM scalar bias.
    acc = jnp.dot(x_ref[...], w_ref[...], preferred_element_type=jnp.float32)
    o_ref[...] = (acc + b_ref[0, 0]).astype(o_ref.dtype)


def _round_up(n, m):
    return (n + m - 1) // m * m


@functools.partial(jax.jit, static_argnames=("block_b",))
def aesthetic_predictor(x, w_fold, b_fold, *, block_b=BLOCK_B):
    """x: (B, D) f32 or bf16 (bf16 is the fast path — x reads dominate HBM time).

    w_fold: (D, 1) f32.  b_fold: (1, 1) f32.  Returns (B, 1) f32.
    """
    B, D = x.shape
    assert w_fold.shape == (D, 1), (w_fold.shape, D)
    assert x.dtype in (jnp.float32, jnp.bfloat16), (
        "supported input dtypes: float32, bfloat16", x.dtype)

    itemsize = x.dtype.itemsize
    # Sublane alignment for the batch tile: 8 rows for f32, 16 for bf16.
    min_sublane = 8 * max(1, 4 // itemsize)

    if B <= min_sublane:
        # Single block spanning the full batch dim (full-extent blocks are
        # always lowerable regardless of (8,128) divisibility).
        tb = B
    else:
        # Cap the tile so the grid has >= 2 steps: on v7x the "parallel" batch
        # axis then shards across both TensorCores (~2x aggregate HBM pull);
        # on v5e/v6e the extra step is ~0.35 us, i.e. noise.
        tb = min(block_b, _round_up(pl.cdiv(B, 2), min_sublane))
    grid_b = pl.cdiv(B, tb)   # last block may be partial: input DMA clamped,
                              # output writeback masked by Pallas.

    w = w_fold.astype(x.dtype)                       # bf16 weight if x is bf16
    b = b_fold.astype(jnp.float32).reshape(1, 1)     # scalar bias, lives in SMEM

    # VMEM footprint (x is double-buffered by the BlockSpec pipeline).  Only
    # override the scoped-VMEM limit if a sweep pushes past v5e's 16 MiB default
    # (TB=1024 f32 needs ~6 MiB, so this normally stays off).
    vmem_need = 2 * tb * D * itemsize + 2 * D * itemsize + 2 * tb * 4 + (1 << 16)
    compiler_kwargs = {}
    if vmem_need > (16 << 20):
        compiler_kwargs["vmem_limit_bytes"] = min(
            _round_up(vmem_need, 1 << 20) + (4 << 20), 32 << 20)

    bytes_accessed = int(B * D * itemsize        # x read (dominant)
                         + D * w.dtype.itemsize  # folded weight (read once)
                         + 4                     # bias
                         + B * 4)                # output write

    out = pl.pallas_call(
        folded_affine_kernel,
        out_shape=jax.ShapeDtypeStruct((B, 1), jnp.float32),
        grid=(grid_b,),
        in_specs=[
            pl.BlockSpec((tb, D), lambda i: (i, 0)),    # x batch tile
            pl.BlockSpec((D, 1), lambda i: (0, 0)),     # folded weight (constant block)
            pl.BlockSpec(memory_space=pltpu.MemorySpace.SMEM),  # scalar bias
        ],
        out_specs=pl.BlockSpec((tb, 1), lambda i: (i, 0)),
        compiler_params=pltpu.CompilerParams(
            dimension_semantics=("parallel",), **compiler_kwargs),
        cost_estimate=pl.CostEstimate(
            flops=2 * B * D,
            transcendentals=0,
            bytes_accessed=bytes_accessed),
    )(x, w, b)

    return out


def reference(x, params):
    """Unfused 5-layer forward pass (Dropout layers are identity at inference)."""
    h = x.astype(jnp.float32)
    for w, b in params:
        h = h @ w + b
    return h


if __name__ == "__main__":
    key = jax.random.PRNGKey(0)
    kx_small, kx_mid, kx_bf16, kp = jax.random.split(key, 4)

    input_size = INPUT_SIZE
    params = init_params(kp, input_size)
    w_fold, b_fold = fold_params(params)

    # 1) Tiny batch — single full-extent block (B < sublane alignment).
    x_small = jax.random.normal(kx_small, (4, input_size), jnp.float32)
    out_small = jax.block_until_ready(aesthetic_predictor(x_small, w_fold, b_fold))
    ref_small = reference(x_small, params)
    assert out_small.shape == (4, 1)
    assert jnp.allclose(out_small, ref_small, atol=1e-3, rtol=1e-3)

    # 2) Ragged batch — 2 grid steps with a partial last block, no jnp.pad copy.
    x_mid = jax.random.normal(kx_mid, (40, input_size), jnp.float32)
    out_mid = jax.block_until_ready(aesthetic_predictor(x_mid, w_fold, b_fold))
    ref_mid = reference(x_mid, params)
    assert out_mid.shape == (40, 1)
    assert jnp.allclose(out_mid, ref_mid, atol=1e-3, rtol=1e-3)

    # 3) bf16 fast path — halves the dominant x HBM read, f32 accumulation.
    x_bf = jax.random.normal(kx_bf16, (300, input_size), jnp.float32)
    out_bf16 = jax.block_until_ready(
        aesthetic_predictor(x_bf.astype(jnp.bfloat16), w_fold, b_fold))
    ref_bf = reference(x_bf, params)
    assert out_bf16.shape == (300, 1)
    assert jnp.allclose(out_bf16, ref_bf, atol=2e-2, rtol=2e-2)

    print("KERNEL_OK")
</pallas_src>

<mosaic_0001>
module attributes {stable_mosaic.version = 11 : i64} {
  func.func @folded_affine_kernel(%arg0: i32, %arg1: memref<4x768xf32, #tpu.memory_space<vmem>>, %arg2: memref<768x1xf32, #tpu.memory_space<vmem>>, %arg3: memref<1x1xf32, #tpu.memory_space<smem>>, %arg4: memref<4x1xf32, #tpu.memory_space<vmem>>) attributes {dimension_semantics = [#tpu.dimension_semantics<parallel>], iteration_bounds = array<i64: 1>, scalar_prefetch = 0 : i64, scratch_operands = 0 : i64, tpu.core_type = #tpu.core_type<tc>, window_params = [{transform_indices = @transform_0, window_bounds = array<i64: 4, 768>}, {pipeline_mode = #tpu.pipeline_mode<synchronous>, transform_indices = @transform_1, window_bounds = array<i64: 768, 1>}, {transform_indices = @transform_2, window_bounds = array<i64: 1, 1>}, {transform_indices = @transform_3, window_bounds = array<i64: 4, 1>}]} {
    %c0 = arith.constant 0 : index
    %c0_0 = arith.constant 0 : index
    %0 = vector.load %arg1[%c0, %c0_0] : memref<4x768xf32, #tpu.memory_space<vmem>>, vector<4x768xf32>
    %c0_1 = arith.constant 0 : index
    %c0_2 = arith.constant 0 : index
    %1 = vector.load %arg2[%c0_1, %c0_2] : memref<768x1xf32, #tpu.memory_space<vmem>>, vector<768x1xf32>
    %cst = arith.constant dense<0.000000e+00> : vector<4x1xf32>
    %2 = tpu.matmul %0, %1, %cst {dimension_numbers = #tpu.dot_dimension_numbers<[1], [0], [0], [1], [0, 0, 1, 1], [], []>} : vector<4x768xf32>, vector<768x1xf32>, vector<4x1xf32> -> vector<4x1xf32>
    %c0_3 = arith.constant 0 : index
    %c0_4 = arith.constant 0 : index
    %3 = memref.load %arg3[%c0_3, %c0_4] : memref<1x1xf32, #tpu.memory_space<smem>>
    %4 = vector.broadcast %3 : f32 to vector<4x1xf32>
    %5 = arith.addf %2, %4 : vector<4x1xf32>
    %c0_5 = arith.constant 0 : index
    %c0_6 = arith.constant 0 : index
    %6 = vector.load %arg4[%c0_5, %c0_6] : memref<4x1xf32, #tpu.memory_space<vmem>>, vector<4x1xf32>
    tpu.vector_store %arg4[%c0_5, %c0_6], %5 {strides = array<i32>} : memref<4x1xf32, #tpu.memory_space<vmem>>, vector<4x1xf32>,
    return
  }
  func.func @transform_0(%arg0: i32) -> (i32, i32) {
    %c0_i32 = arith.constant 0 : i32
    %c0_i32_0 = arith.constant 0 : i32
    return %arg0, %c0_i32 : i32, i32
  }
  func.func @transform_1(%arg0: i32) -> (i32, i32) {
    %c0_i32 = arith.constant 0 : i32
    %c0_i32_0 = arith.constant 0 : i32
    %c0_i32_1 = arith.constant 0 : i32
    return %c0_i32, %c0_i32_0 : i32, i32
  }
  func.func @transform_2(%arg0: i32) -> (i32, i32) {
    %c0_i32 = arith.constant 0 : i32
    %c0_i32_0 = arith.constant 0 : i32
    %c0_i32_1 = arith.constant 0 : i32
    return %c0_i32, %c0_i32_0 : i32, i32
  }
  func.func @transform_3(%arg0: i32) -> (i32, i32) {
    %c0_i32 = arith.constant 0 : i32
    %c0_i32_0 = arith.constant 0 : i32
    return %arg0, %c0_i32 : i32, i32
  }
}

</mosaic_0001>

<llo_original>
// kernel: aesthetic_predictor.1
$region0: #{aesthetic_predictor.1}
  #allocation0 [shape = 'u32[]', space=smem, size = 0x4, offset = 0x4, fixed_abs, tag = 'smem constant byte address 0x4 - core index']
  #allocation1 [shape = 'u32[144,128]{1,0:T(1,128)}', space=vmem, size = 0x12000, scoped, tag = 'internal scratch']
  #allocation2 [shape = 'f32[1,1]{1,0:T(1,128)S(6)}', space=smem, size = 0x200, scoped, tag = 'scoped memory for aesthetic_predictor.1']
  %s0 = inlined_call_operand.vmem [shape: f32[4,768], index: 0, kind: input, shape index: {}]
  %s1 = inlined_call_operand.vmem [shape: f32[768,1], index: 1, kind: input, shape index: {}]
  %s2 = inlined_call_operand.<no memory space> [shape: f32[1,1], index: 2, kind: input, shape index: {}]
  %s3 = inlined_call_operand.vmem [shape: f32[4,1], index: 3, kind: output, shape index: {}]
  %s4 = sld [smem:[#allocation0]]
  $region22: #{aesthetic_predictor.1} parent=0
    _
  %s6 = ssub.s32 1, %s4
  %s7 = scalar_select 0, %s6, %s4
  %8 = sst [smem:[#allocation2]] %s2
  // Predicated region
  $region2: #{aesthetic_predictor.1} parent=0 // pred_check
    _
  $region3: #{aesthetic_predictor.1} parent=0 // pred_check_branch
    %10 = sbr.rel (0) target = $region5
  $region4: #{aesthetic_predictor.1} parent=0 // pred_region
    _
  $region5: #{aesthetic_predictor.1} parent=0 // pred_fallthru
    _
  // Predicated region
  $region6: #{aesthetic_predictor.1} parent=0 // pred_check
    _
  $region7: #{aesthetic_predictor.1} parent=0 // pred_check_branch
    %12 = sbr.rel (0) target = $region9
  $region8: #{aesthetic_predictor.1} parent=0 // pred_region
    _
  $region9: #{aesthetic_predictor.1} parent=0 // pred_fallthru
    _
  // Predicated region
  $region10: #{aesthetic_predictor.1} parent=0 // pred_check
    _
  $region11: #{aesthetic_predictor.1} parent=0 // pred_check_branch
    %14 = sbr.rel (0) target = $region13
  $region12: #{aesthetic_predictor.1} parent=0 // pred_region
    _
  $region13: #{aesthetic_predictor.1} parent=0 // pred_fallthru
    _
  %v15 = vld [vmem:[%s0] sm:$0xff]
  %v16 = vld [vmem:[%s0 + $0x8] sm:$0xff]
  %v17 = vld [vmem:[%s0 + $0x10] sm:$0xff]
  %v18 = vld [vmem:[%s1] sm:$0xff]
  %v19 = vld [vmem:[%s1 + $0x8] sm:$0xff]
  %v20 = vld [vmem:[%s1 + $0x10] sm:$0xff]
  %v21 = vld [vmem:[%s1 + $0x18] sm:$0xff]
  %v22 = vld [vmem:[%s1 + $0x20] sm:$0xff]
  %v23 = vld [vmem:[%s1 + $0x28] sm:$0xff]
  %v24 = vld [vmem:[%s1 + $0x30] sm:$0xff]
  %v25 = vld [vmem:[%s1 + $0x38] sm:$0xff]
  %v26 = vld [vmem:[%s1 + $0x40] sm:$0xff]
  %v27 = vld [vmem:[%s1 + $0x48] sm:$0xff]
  %v28 = vld [vmem:[%s1 + $0x50] sm:$0xff]
  %v29 = vld [vmem:[%s1 + $0x58] sm:$0xff]
  %v30 = vld [vmem:[%s1 + $0x60] sm:$0xff]
  %v31 = vld [vmem:[%s1 + $0x68] sm:$0xff]
  %v32 = vld [vmem:[%s1 + $0x70] sm:$0xff]
  %v33 = vld [vmem:[%s1 + $0x78] sm:$0xff]
  %v34 = vld [vmem:[%s1 + $0x80] sm:$0xff]
  %v35 = vld [vmem:[%s1 + $0x88] sm:$0xff]
  %v36 = vld [vmem:[%s1 + $0x90] sm:$0xff]
  %v37 = vld [vmem:[%s1 + $0x98] sm:$0xff]
  %v38 = vld [vmem:[%s1 + $0xa0] sm:$0xff]
  %v39 = vld [vmem:[%s1 + $0xa8] sm:$0xff]
  %v40 = vld [vmem:[%s1 + $0xb0] sm:$0xff]
  %v41 = vld [vmem:[%s1 + $0xb8] sm:$0xff]
  %v42 = vld [vmem:[%s1 + $0xc0] sm:$0xff]
  %v43 = vld [vmem:[%s1 + $0xc8] sm:$0xff]
  %v44 = vld [vmem:[%s1 + $0xd0] sm:$0xff]
  %v45 = vld [vmem:[%s1 + $0xd8] sm:$0xff]
  %v46 = vld [vmem:[%s1 + $0xe0] sm:$0xff]
  %v47 = vld [vmem:[%s1 + $0xe8] sm:$0xff]
  %v48 = vld [vmem:[%s1 + $0xf0] sm:$0xff]
  %v49 = vld [vmem:[%s1 + $0xf8] sm:$0xff]
  %v50 = vld [vmem:[%s1 + $0x100] sm:$0xff]
  %v51 = vld [vmem:[%s1 + $0x108] sm:$0xff]
  %v52 = vld [vmem:[%s1 + $0x110] sm:$0xff]
  %v53 = vld [vmem:[%s1 + $0x118] sm:$0xff]
  %v54 = vld [vmem:[%s1 + $0x120] sm:$0xff]
  %v55 = vld [vmem:[%s1 + $0x128] sm:$0xff]
  %v56 = vld [vmem:[%s1 + $0x130] sm:$0xff]
  %v57 = vld [vmem:[%s1 + $0x138] sm:$0xff]
  %v58 = vld [vmem:[%s1 + $0x140] sm:$0xff]
  %v59 = vld [vmem:[%s1 + $0x148] sm:$0xff]
  %v60 = vld [vmem:[%s1 + $0x150] sm:$0xff]
  %v61 = vld [vmem:[%s1 + $0x158] sm:$0xff]
  %v62 = vld [vmem:[%s1 + $0x160] sm:$0xff]
  %v63 = vld [vmem:[%s1 + $0x168] sm:$0xff]
  %v64 = vld [vmem:[%s1 + $0x170] sm:$0xff]
  %v65 = vld [vmem:[%s1 + $0x178] sm:$0xff]
  %v66 = vld [vmem:[%s1 + $0x180] sm:$0xff]
  %v67 = vld [vmem:[%s1 + $0x188] sm:$0xff]
  %v68 = vld [vmem:[%s1 + $0x190] sm:$0xff]
  %v69 = vld [vmem:[%s1 + $0x198] sm:$0xff]
  %v70 = vld [vmem:[%s1 + $0x1a0] sm:$0xff]
  %v71 = vld [vmem:[%s1 + $0x1a8] sm:$0xff]
  %v72 = vld [vmem:[%s1 + $0x1b0] sm:$0xff]
  %v73 = vld [vmem:[%s1 + $0x1b8] sm:$0xff]
  %v74 = vld [vmem:[%s1 + $0x1c0] sm:$0xff]
  %v75 = vld [vmem:[%s1 + $0x1c8] sm:$0xff]
  %v76 = vld [vmem:[%s1 + $0x1d0] sm:$0xff]
  %v77 = vld [vmem:[%s1 + $0x1d8] sm:$0xff]
  %v78 = vld [vmem:[%s1 + $0x1e0] sm:$0xff]
  %v79 = vld [vmem:[%s1 + $0x1e8] sm:$0xff]
  %v80 = vld [vmem:[%s1 + $0x1f0] sm:$0xff]
  %v81 = vld [vmem:[%s1 + $0x1f8] sm:$0xff]
  %v82 = vld [vmem:[%s1 + $0x200] sm:$0xff]
  %v83 = vld [vmem:[%s1 + $0x208] sm:$0xff]
  %v84 = vld [vmem:[%s1 + $0x210] sm:$0xff]
  %v85 = vld [vmem:[%s1 + $0x218] sm:$0xff]
  %v86 = vld [vmem:[%s1 + $0x220] sm:$0xff]
  %v87 = vld [vmem:[%s1 + $0x228] sm:$0xff]
  %v88 = vld [vmem:[%s1 + $0x230] sm:$0xff]
  %v89 = vld [vmem:[%s1 + $0x238] sm:$0xff]
  %v90 = vld [vmem:[%s1 + $0x240] sm:$0xff]
  %v91 = vld [vmem:[%s1 + $0x248] sm:$0xff]
  %v92 = vld [vmem:[%s1 + $0x250] sm:$0xff]
  %v93 = vld [vmem:[%s1 + $0x258] sm:$0xff]
  %v94 = vld [vmem:[%s1 + $0x260] sm:$0xff]
  %v95 = vld [vmem:[%s1 + $0x268] sm:$0xff]
  %v96 = vld [vmem:[%s1 + $0x270] sm:$0xff]
  %v97 = vld [vmem:[%s1 + $0x278] sm:$0xff]
  %v98 = vld [vmem:[%s1 + $0x280] sm:$0xff]
  %v99 = vld [vmem:[%s1 + $0x288] sm:$0xff]
  %v100 = vld [vmem:[%s1 + $0x290] sm:$0xff]
  %v101 = vld [vmem:[%s1 + $0x298] sm:$0xff]
  %v102 = vld [vmem:[%s1 + $0x2a0] sm:$0xff]
  %v103 = vld [vmem:[%s1 + $0x2a8] sm:$0xff]
  %v104 = vld [vmem:[%s1 + $0x2b0] sm:$0xff]
  %v105 = vld [vmem:[%s1 + $0x2b8] sm:$0xff]
  %v106 = vld [vmem:[%s1 + $0x2c0] sm:$0xff]
  %v107 = vld [vmem:[%s1 + $0x2c8] sm:$0xff]
  %v108 = vld [vmem:[%s1 + $0x2d0] sm:$0xff]
  %v109 = vld [vmem:[%s1 + $0x2d8] sm:$0xff]
  %v110 = vld [vmem:[%s1 + $0x2e0] sm:$0xff]
  %v111 = vld [vmem:[%s1 + $0x2e8] sm:$0xff]
  %v112 = vld [vmem:[%s1 + $0x2f0] sm:$0xff]
  %v113 = vld [vmem:[%s1 + $0x2f8] sm:$0xff]
  %s114 = sld [smem:[#allocation2]]
  %v115 = vstv %s114
  %v119 = vcombine.high %v15, %v15
  %v120 = vcombine.high %v16, %v16
  %v121 = vcombine.high %v17, %v17
  %125 = vmatprep.subr.mxu0 0.0
  %126 = vmatpush1.msra.mxu0 %v18
  %127 = vmatprep.subr.mxu0 0.0
  %128 = vmatpush1.msra.mxu0 %v19
  %129 = vmatprep.subr.mxu0 0.0
  %130 = vmatpush1.msra.mxu0 %v20
  %131 = vmatprep.subr.mxu0 0.0
  %132 = vmatpush1.msra.mxu0 %v21
  %133 = vmatprep.subr.mxu0 0.0
  %134 = vmatpush1.msra.mxu0 %v22
  %135 = vmatprep.subr.mxu0 0.0
  %136 = vmatpush1.msra.mxu0 %v23
  %137 = vmatprep.subr.mxu0 0.0
  %138 = vmatpush1.msra.mxu0 %v24
  %139 = vmatprep.subr.mxu0 0.0
  %140 = vmatpush1.msra.mxu0 %v25
  %141 = vmatprep.subr.mxu0 0.0
  %142 = vmatpush1.msra.mxu0 %v26
  %143 = vmatprep.subr.mxu0 0.0
  %144 = vmatpush1.msra.mxu0 %v27
  %145 = vmatprep.subr.mxu0 0.0
  %146 = vmatpush1.msra.mxu0 %v28
  %147 = vmatprep.subr.mxu0 0.0
  %148 = vmatpush1.msra.mxu0 %v29
  %149 = vmatprep.subr.mxu0 0.0
  %150 = vmatpush1.msra.mxu0 %v30
  %151 = vmatprep.subr.mxu0 0.0
  %152 = vmatpush1.msra.mxu0 %v31
  %153 = vmatprep.subr.mxu0 0.0
  %154 = vmatpush1.msra.mxu0 %v32
  %155 = vmatprep.subr.mxu0 0.0
  %156 = vmatpush1.msra.mxu0 %v33
  %157 = vmatprep.subr.mxu0 0.0
  %158 = vmatpush1.msra.mxu0 %v34
  %159 = vmatprep.subr.mxu0 0.0
  %160 = vmatpush1.msra.mxu0 %v35
  %161 = vmatprep.subr.mxu0 0.0
  %162 = vmatpush1.msra.mxu0 %v36
  %163 = vmatprep.subr.mxu0 0.0
  %164 = vmatpush1.msra.mxu0 %v37
  %165 = vmatprep.subr.mxu0 0.0
  %166 = vmatpush1.msra.mxu0 %v38
  %167 = vmatprep.subr.mxu0 0.0
  %168 = vmatpush1.msra.mxu0 %v39
  %169 = vmatprep.subr.mxu0 0.0
  %170 = vmatpush1.msra.mxu0 %v40
  %171 = vmatprep.subr.mxu0 0.0
  %172 = vmatpush1.msra.mxu0 %v41
  %173 = vmatprep.subr.mxu0 0.0
  %174 = vmatpush1.msra.mxu0 %v42
  %175 = vmatprep.subr.mxu0 0.0
  %176 = vmatpush1.msra.mxu0 %v43
  %177 = vmatprep.subr.mxu0 0.0
  %178 = vmatpush1.msra.mxu0 %v44
  %179 = vmatprep.subr.mxu0 0.0
  %180 = vmatpush1.msra.mxu0 %v45
  %181 = vmatprep.subr.mxu0 0.0
  %182 = vmatpush1.msra.mxu0 %v46
  %183 = vmatprep.subr.mxu0 0.0
  %184 = vmatpush1.msra.mxu0 %v47
  %185 = vmatprep.subr.mxu0 0.0
  %186 = vmatpush1.msra.mxu0 %v48
  %187 = vmatprep.subr.mxu0 0.0
  %188 = vmatpush1.msra.mxu0 %v49
  %189 = vmatprep.mubr.f32.mxu0 %v119
  %190 = vmatmul.mubr.f32.gmra.mrb[0].mxu0 %v15
  %v191 = vpop.f32.mrb[0].mxu0
  %v192 = vadd.f32 %v115, %v191
  %v193 = vpop.f32.mrb[0].mxu0
  %194 = vdwg.mxu0
  %195 = vmatprep.subr.mxu0 0.0
  %196 = vmatpush1.msra.mxu0 %v50
  %197 = vmatprep.subr.mxu0 0.0
  %198 = vmatpush1.msra.mxu0 %v51
  %199 = vmatprep.subr.mxu0 0.0
  %200 = vmatpush1.msra.mxu0 %v52
  %201 = vmatprep.subr.mxu0 0.0
  %202 = vmatpush1.msra.mxu0 %v53
  %203 = vmatprep.subr.mxu0 0.0
  %204 = vmatpush1.msra.mxu0 %v54
  %205 = vmatprep.subr.mxu0 0.0
  %206 = vmatpush1.msra.mxu0 %v55
  %207 = vmatprep.subr.mxu0 0.0
  %208 = vmatpush1.msra.mxu0 %v56
  %209 = vmatprep.subr.mxu0 0.0
  %210 = vmatpush1.msra.mxu0 %v57
  %211 = vmatprep.subr.mxu0 0.0
  %212 = vmatpush1.msra.mxu0 %v58
  %213 = vmatprep.subr.mxu0 0.0
  %214 = vmatpush1.msra.mxu0 %v59
  %215 = vmatprep.subr.mxu0 0.0
  %216 = vmatpush1.msra.mxu0 %v60
  %217 = vmatprep.subr.mxu0 0.0
  %218 = vmatpush1.msra.mxu0 %v61
  %219 = vmatprep.subr.mxu0 0.0
  %220 = vmatpush1.msra.mxu0 %v62
  %221 = vmatprep.subr.mxu0 0.0
  %222 = vmatpush1.msra.mxu0 %v63
  %223 = vmatprep.subr.mxu0 0.0
  %224 = vmatpush1.msra.mxu0 %v64
  %225 = vmatprep.subr.mxu0 0.0
  %226 = vmatpush1.msra.mxu0 %v65
  %227 = vmatprep.subr.mxu0 0.0
  %228 = vmatpush1.msra.mxu0 %v66
  %229 = vmatprep.subr.mxu0 0.0
  %230 = vmatpush1.msra.mxu0 %v67
  %231 = vmatprep.subr.mxu0 0.0
  %232 = vmatpush1.msra.mxu0 %v68
  %233 = vmatprep.subr.mxu0 0.0
  %234 = vmatpush1.msra.mxu0 %v69
  %235 = vmatprep.subr.mxu0 0.0
  %236 = vmatpush1.msra.mxu0 %v70
  %237 = vmatprep.subr.mxu0 0.0
  %238 = vmatpush1.msra.mxu0 %v71
  %239 = vmatprep.subr.mxu0 0.0
  %240 = vmatpush1.msra.mxu0 %v72
  %241 = vmatprep.subr.mxu0 0.0
  %242 = vmatpush1.msra.mxu0 %v73
  %243 = vmatprep.subr.mxu0 0.0
  %244 = vmatpush1.msra.mxu0 %v74
  %245 = vmatprep.subr.mxu0 0.0
  %246 = vmatpush1.msra.mxu0 %v75
  %247 = vmatprep.subr.mxu0 0.0
  %248 = vmatpush1.msra.mxu0 %v76
  %249 = vmatprep.subr.mxu0 0.0
  %250 = vmatpush1.msra.mxu0 %v77
  %251 = vmatprep.subr.mxu0 0.0
  %252 = vmatpush1.msra.mxu0 %v78
  %253 = vmatprep.subr.mxu0 0.0
  %254 = vmatpush1.msra.mxu0 %v79
  %255 = vmatprep.subr.mxu0 0.0
  %256 = vmatpush1.msra.mxu0 %v80
  %257 = vmatprep.subr.mxu0 0.0
  %258 = vmatpush1.msra.mxu0 %v81
  %259 = vmatprep.mubr.f32.mxu0 %v120
  %260 = vmatmul.mubr.f32.gmra.mrb[0].mxu0 %v16
  %v261 = vpop.f32.mrb[0].mxu0
  %v262 = vadd.f32 %v192, %v261
  %v263 = vpop.f32.mrb[0].mxu0
  %264 = vdwg.mxu0
  %265 = vmatprep.subr.mxu0 0.0
  %266 = vmatpush1.msra.mxu0 %v82
  %267 = vmatprep.subr.mxu0 0.0
  %268 = vmatpush1.msra.mxu0 %v83
  %269 = vmatprep.subr.mxu0 0.0
  %270 = vmatpush1.msra.mxu0 %v84
  %271 = vmatprep.subr.mxu0 0.0
  %272 = vmatpush1.msra.mxu0 %v85
  %273 = vmatprep.subr.mxu0 0.0
  %274 = vmatpush1.msra.mxu0 %v86
  %275 = vmatprep.subr.mxu0 0.0
  %276 = vmatpush1.msra.mxu0 %v87
  %277 = vmatprep.subr.mxu0 0.0
  %278 = vmatpush1.msra.mxu0 %v88
  %279 = vmatprep.subr.mxu0 0.0
  %280 = vmatpush1.msra.mxu0 %v89
  %281 = vmatprep.subr.mxu0 0.0
  %282 = vmatpush1.msra.mxu0 %v90
  %283 = vmatprep.subr.mxu0 0.0
  %284 = vmatpush1.msra.mxu0 %v91
  %285 = vmatprep.subr.mxu0 0.0
  %286 = vmatpush1.msra.mxu0 %v92
  %287 = vmatprep.subr.mxu0 0.0
  %288 = vmatpush1.msra.mxu0 %v93
  %289 = vmatprep.subr.mxu0 0.0
  %290 = vmatpush1.msra.mxu0 %v94
  %291 = vmatprep.subr.mxu0 0.0
  %292 = vmatpush1.msra.mxu0 %v95
  %293 = vmatprep.subr.mxu0 0.0
  %294 = vmatpush1.msra.mxu0 %v96
  %295 = vmatprep.subr.mxu0 0.0
  %296 = vmatpush1.msra.mxu0 %v97
  %297 = vmatprep.subr.mxu0 0.0
  %298 = vmatpush1.msra.mxu0 %v98
  %299 = vmatprep.subr.mxu0 0.0
  %300 = vmatpush1.msra.mxu0 %v99
  %301 = vmatprep.subr.mxu0 0.0
  %302 = vmatpush1.msra.mxu0 %v100
  %303 = vmatprep.subr.mxu0 0.0
  %304 = vmatpush1.msra.mxu0 %v101
  %305 = vmatprep.subr.mxu0 0.0
  %306 = vmatpush1.msra.mxu0 %v102
  %307 = vmatprep.subr.mxu0 0.0
  %308 = vmatpush1.msra.mxu0 %v103
  %309 = vmatprep.subr.mxu0 0.0
  %310 = vmatpush1.msra.mxu0 %v104
  %311 = vmatprep.subr.mxu0 0.0
  %312 = vmatpush1.msra.mxu0 %v105
  %313 = vmatprep.subr.mxu0 0.0
  %314 = vmatpush1.msra.mxu0 %v106
  %315 = vmatprep.subr.mxu0 0.0
  %316 = vmatpush1.msra.mxu0 %v107
  %317 = vmatprep.subr.mxu0 0.0
  %318 = vmatpush1.msra.mxu0 %v108
  %319 = vmatprep.subr.mxu0 0.0
  %320 = vmatpush1.msra.mxu0 %v109
  %321 = vmatprep.subr.mxu0 0.0
  %322 = vmatpush1.msra.mxu0 %v110
  %323 = vmatprep.subr.mxu0 0.0
  %324 = vmatpush1.msra.mxu0 %v111
  %325 = vmatprep.subr.mxu0 0.0
  %326 = vmatpush1.msra.mxu0 %v112
  %327 = vmatprep.subr.mxu0 0.0
  %328 = vmatpush1.msra.mxu0 %v113
  %329 = vmatprep.mubr.f32.mxu0 %v121
  %330 = vmatmul.mubr.f32.gmra.mrb[0].mxu0 %v17
  %v331 = vpop.f32.mrb[0].mxu0
  %v332 = vadd.f32 %v262, %v331
  %v333 = vpop.f32.mrb[0].mxu0
  %334 = vdwg.mxu0
  %vm335 = vcmask 3072
  %336 = vst.msk [vmem:[%s3] sm:$0xf] %vm335, %v332
  // Predicated region
  $region14: #{aesthetic_predictor.1} parent=0 // pred_check
    _
  $region15: #{aesthetic_predictor.1} parent=0 // pred_check_branch
    %338 = sbr.rel (0) target = $region17
  $region16: #{aesthetic_predictor.1} parent=0 // pred_region
    _
  $region17: #{aesthetic_predictor.1} parent=0 // pred_fallthru
    _
  // Predicated region
  $region18: #{aesthetic_predictor.1} parent=0 // pred_check
    _
  $region19: #{aesthetic_predictor.1} parent=0 // pred_check_branch
    %340 = sbr.rel (0) target = $region21
  $region20: #{aesthetic_predictor.1} parent=0 // pred_region
    _
  $region21: #{aesthetic_predictor.1} parent=0 // pred_fallthru
    _

</llo_original>
